<compile_context>
chip_gen: v7x
topology: tpu7x:2x2x1
jax: 0.10.0
libtpu: 0.0.40
codegen_flags: <defaults>
</compile_context>

<pallas_src>
import jax
import jax.numpy as jnp
from jax import lax
from jax.experimental import pallas as pl
from jax.experimental.pallas import tpu as pltpu


def gru_forecast_kernel(x_ref,       # [T*C, V*L]   (host pre-flattened, variables on lanes)
                        wih0_ref,    # [V*L, 3*G]   block-diag per gate (G = V*d_ff)
                        whh0_ref,    # [G,   3*G]
                        bx0_ref,     # [1,   3*G]   (bir+bhr | biz+bhz | bin)
                        bhn0_ref,    # [1,   G  ]   b_hn (stays inside the reset product)
                        wih1_ref,    # [G,   3*G]
                        whh1_ref,    # [G,   3*G]
                        bx1_ref,     # [1,   3*G]
                        bhn1_ref,    # [1,   G  ]
                        wlin_ref,    # [G,   P  ]   vertically stacked => sum over variables
                        blin_ref,    # [1,   P  ]   sum of per-variable biases
                        out_ref,     # [T*C, P]
                        gx0_ref,     # VMEM scratch [T, C, 3*G]
                        h1s_ref):    # VMEM scratch [T, C, G]
    T, C, G3 = gx0_ref.shape
    G = G3 // 3

    def dot(a, b):
        return jnp.dot(a, b, preferred_element_type=jnp.float32)

    # ---- hoisted layer-0 input projection for ALL timesteps: one matmul -------------
    gx0_all = dot(x_ref[...], wih0_ref[...]) + bx0_ref[...]          # [T*C, 3*G]
    for t in range(T):                                               # static scatter
        gx0_ref[t] = gx0_all[t * C:(t + 1) * C, :]

    # ---- weights resident as values; biases pre-broadcast once ----------------------
    whh0 = whh0_ref[...]
    wih1 = wih1_ref[...]
    whh1 = whh1_ref[...]
    bx1 = jnp.broadcast_to(bx1_ref[...], (C, G3))
    bhn0 = jnp.broadcast_to(bhn0_ref[...], (C, G))
    bhn1 = jnp.broadcast_to(bhn1_ref[...], (C, G))

    def gru_update(gx, gh, bhn, h):
        # gate order along lanes: [r | z | n], each chunk of width G
        r = jax.nn.sigmoid(gx[:, :G] + gh[:, :G])
        z = jax.nn.sigmoid(gx[:, G:2 * G] + gh[:, G:2 * G])
        n = jnp.tanh(gx[:, 2 * G:] + r * (gh[:, 2 * G:] + bhn))
        return (1.0 - z) * n + z * h

    def step(t, carry):
        h0, h1 = carry
        h0n = gru_update(gx0_ref[t], dot(h0, whh0), bhn0, h0)
        h1n = gru_update(dot(h0n, wih1) + bx1, dot(h1, whh1), bhn1, h1)
        h1s_ref[t] = h1n
        return h0n, h1n

    h_init = jnp.zeros((C, G), jnp.float32)
    lax.fori_loop(0, T, step, (h_init, h_init), unroll=True)

    # ---- hoisted output projection (+ sum over variables): one matmul, one store ----
    h1_flat = jnp.concatenate([h1s_ref[t] for t in range(T)], axis=0)   # [T*C, G]
    out_ref[...] = dot(h1_flat, wlin_ref[...]) + blin_ref[...]


def pack_params(params, V, d_ff):
    """Pack per-variable GRU weights into gate-packed, variable-block-diagonal matrices."""
    G = V * d_ff

    def blockdiag(w):                       # [V, 3, In, d_ff] -> [V*In, 3*G]
        In = w.shape[2]
        out = jnp.zeros((V * In, 3 * G), jnp.float32)
        for g in range(3):
            for v in range(V):
                out = out.at[v * In:(v + 1) * In,
                             g * G + v * d_ff: g * G + (v + 1) * d_ff].set(w[v, g])
        return out

    def pack_layer(wih, whh, bih, bhh):
        bih = bih.reshape(V, 3, d_ff)
        bhh = bhh.reshape(V, 3, d_ff)
        # Fold hidden-side r/z biases into the input-side bias; b_hn must stay inside
        # the reset-gate product (PyTorch GRU semantics).
        bx = bih.at[:, 0:2].add(bhh[:, 0:2])
        bx = bx.transpose(1, 0, 2).reshape(1, 3 * G)      # gate-major, then variable
        bhn = bhh[:, 2].reshape(1, G)
        return blockdiag(wih), blockdiag(whh), bx, bhn

    wih0, whh0, bx0, bhn0 = pack_layer(params["wih0"], params["whh0"],
                                       params["bih0"], params["bhh0"])
    wih1, whh1, bx1, bhn1 = pack_layer(params["wih1"], params["whh1"],
                                       params["bih1"], params["bhh1"])
    wlin = params["wlin"].reshape(G, -1)                  # [G, P] stacked => sum over v
    blin = jnp.sum(params["blin"], axis=0)                # [1, P]
    return dict(wih0=wih0, whh0=whh0, bx0=bx0, bhn0=bhn0,
                wih1=wih1, whh1=whh1, bx1=bx1, bhn1=bhn1,
                wlin=wlin, blin=blin)


def gru_forecast(x_enc, params, num_vars, channels):
    B, VC, L = x_enc.shape
    V, C = num_vars, channels
    assert VC == V * C
    d_ff = params["whh0"].shape[-1]
    P = params["wlin"].shape[-1]
    G = V * d_ff

    # [B, V*C, L] -> [B*C, V*L]: GRU time = B, GRU batch = C, variables stacked on lanes.
    x = x_enc.reshape(B, V, C, L).transpose(0, 2, 1, 3).reshape(B * C, V * L)

    p = pack_params(params, V, d_ff)

    out2d = pl.pallas_call(
        gru_forecast_kernel,
        out_shape=jax.ShapeDtypeStruct((B * C, P), jnp.float32),
        scratch_shapes=[pltpu.VMEM((B, C, 3 * G), jnp.float32),
                        pltpu.VMEM((B, C, G), jnp.float32)],
    )(x,
      p["wih0"], p["whh0"], p["bx0"], p["bhn0"],
      p["wih1"], p["whh1"], p["bx1"], p["bhn1"],
      p["wlin"], p["blin"])

    out = out2d.reshape(B, C, P)
    # forward(): dec_out[:, :, -pred_len:] is a no-op (last dim already == pred_len)
    return out[:, :, -P:]


def init_params(key, V, C, L, d_ff, P):
    # PyTorch-style uniform(-1/sqrt(d_ff), 1/sqrt(d_ff)) init (deterministic).
    k = 1.0 / float(d_ff) ** 0.5
    keys = jax.random.split(key, 9)

    def u(kk, shape):
        return jax.random.uniform(kk, shape, jnp.float32, -k, k)

    return dict(
        wih0=u(keys[0], (V, 3, L, d_ff)),
        whh0=u(keys[1], (V, 3, d_ff, d_ff)),
        bih0=u(keys[2], (V, 3, 1, d_ff)),
        bhh0=u(keys[3], (V, 3, 1, d_ff)),
        wih1=u(keys[4], (V, 3, d_ff, d_ff)),
        whh1=u(keys[5], (V, 3, d_ff, d_ff)),
        bih1=u(keys[6], (V, 3, 1, d_ff)),
        bhh1=u(keys[7], (V, 3, 1, d_ff)),
        # Module explicitly overrides the Linear weight with 1/d_ff * ones([P, d_ff]).
        wlin=jnp.full((V, d_ff, P), 1.0 / d_ff, jnp.float32),
        blin=u(keys[8], (V, 1, P)),
    )


def reference(x_enc, params, V, C):
    # Pure-JAX reference with the original (unpacked) per-variable weights.
    B, VC, L = x_enc.shape
    x = x_enc.reshape(B, V, C, L).transpose(1, 0, 2, 3)   # [V, B, C, L]
    d_ff = params["whh0"].shape[-1]

    def cell(x_t, h, wih, whh, bih, bhh):
        r = jax.nn.sigmoid(x_t @ wih[0] + bih[0] + h @ whh[0] + bhh[0])
        z = jax.nn.sigmoid(x_t @ wih[1] + bih[1] + h @ whh[1] + bhh[1])
        n = jnp.tanh(x_t @ wih[2] + bih[2] + r * (h @ whh[2] + bhh[2]))
        return (1.0 - z) * n + z * h

    outs = []
    for v in range(V):
        h0 = jnp.zeros((C, d_ff), jnp.float32)
        h1 = jnp.zeros((C, d_ff), jnp.float32)
        ys = []
        for t in range(B):
            h0 = cell(x[v, t], h0, params["wih0"][v], params["whh0"][v],
                      params["bih0"][v], params["bhh0"][v])
            h1 = cell(h0, h1, params["wih1"][v], params["whh1"][v],
                      params["bih1"][v], params["bhh1"][v])
            ys.append(h1 @ params["wlin"][v] + params["blin"][v])
        outs.append(jnp.stack(ys))
    return jnp.sum(jnp.stack(outs), axis=0)


if __name__ == "__main__":
    # configs: seq_len=8, pred_len=4, d_ff=32, enc_in(channels)=4,
    #          decomposition_variables=("trend","seasonal"), composition_function=sum(dim=0)
    B, C, L, d_ff, P = 2, 4, 8, 32, 4
    variables = ("trend", "seasonal")
    V = len(variables)

    key = jax.random.PRNGKey(0)
    kx, kp = jax.random.split(key)
    x_enc = jax.random.normal(kx, (B, V * C, L), jnp.float32)
    x_mark_enc = x_dec = x_mark_dec = None   # unused by the forward pass

    params = init_params(kp, V, C, L, d_ff, P)

    out = gru_forecast(x_enc, params, V, C)
    out = jax.block_until_ready(out)

    ref = reference(x_enc, params, V, C)
    assert out.shape == (B, C, P), out.shape
    assert jnp.allclose(out, ref, atol=1e-4, rtol=1e-4), float(jnp.max(jnp.abs(out - ref)))
    print("KERNEL_OK")
</pallas_src>

<mosaic_0001>
module attributes {stable_mosaic.version = 11 : i64} {
  func.func @gru_forecast_kernel(%arg0: memref<8x16xf32, #tpu.memory_space<vmem>>, %arg1: memref<16x192xf32, #tpu.memory_space<vmem>>, %arg2: memref<64x192xf32, #tpu.memory_space<vmem>>, %arg3: memref<1x192xf32, #tpu.memory_space<vmem>>, %arg4: memref<1x64xf32, #tpu.memory_space<vmem>>, %arg5: memref<64x192xf32, #tpu.memory_space<vmem>>, %arg6: memref<64x192xf32, #tpu.memory_space<vmem>>, %arg7: memref<1x192xf32, #tpu.memory_space<vmem>>, %arg8: memref<1x64xf32, #tpu.memory_space<vmem>>, %arg9: memref<64x4xf32, #tpu.memory_space<vmem>>, %arg10: memref<1x4xf32, #tpu.memory_space<vmem>>, %arg11: memref<8x4xf32, #tpu.memory_space<vmem>>, %arg12: memref<2x4x192xf32, #tpu.memory_space<vmem>>, %arg13: memref<2x4x64xf32, #tpu.memory_space<vmem>>) attributes {dimension_semantics = [], scalar_prefetch = 0 : i64, scratch_operands = 2 : i64, tpu.core_type = #tpu.core_type<tc>} {
    %c0 = arith.constant 0 : index
    %c0_0 = arith.constant 0 : index
    %0 = vector.load %arg0[%c0, %c0_0] : memref<8x16xf32, #tpu.memory_space<vmem>>, vector<8x16xf32>
    %c0_1 = arith.constant 0 : index
    %c0_2 = arith.constant 0 : index
    %1 = vector.load %arg1[%c0_1, %c0_2] : memref<16x192xf32, #tpu.memory_space<vmem>>, vector<16x192xf32>
    %cst = arith.constant dense<0.000000e+00> : vector<8x192xf32>
    %2 = tpu.matmul %0, %1, %cst {dimension_numbers = #tpu.dot_dimension_numbers<[1], [0], [0], [1], [0, 0, 1, 1], [], []>} : vector<8x16xf32>, vector<16x192xf32>, vector<8x192xf32> -> vector<8x192xf32>
    %c0_3 = arith.constant 0 : index
    %c0_4 = arith.constant 0 : index
    %3 = vector.load %arg3[%c0_3, %c0_4] : memref<1x192xf32, #tpu.memory_space<vmem>>, vector<1x192xf32>
    %4 = vector.broadcast %3 : vector<1x192xf32> to vector<8x192xf32>
    %5 = arith.addf %2, %4 : vector<8x192xf32>
    %6 = vector.extract_strided_slice %5 {offsets = [0, 0], sizes = [4, 192], strides = [1, 1]} : vector<8x192xf32> to vector<4x192xf32>
    %c0_5 = arith.constant 0 : index
    %c0_6 = arith.constant 0 : index
    %c0_7 = arith.constant 0 : index
    %7 = vector.load %arg12[%c0_5, %c0_6, %c0_7] : memref<2x4x192xf32, #tpu.memory_space<vmem>>, vector<1x4x192xf32>
    %8 = vector.shape_cast %7 : vector<1x4x192xf32> to vector<4x192xf32>
    %9 = vector.shape_cast %6 : vector<4x192xf32> to vector<1x4x192xf32>
    tpu.vector_store %arg12[%c0_5, %c0_6, %c0_7], %9 {strides = array<i32>} : memref<2x4x192xf32, #tpu.memory_space<vmem>>, vector<1x4x192xf32>,
    %10 = vector.extract_strided_slice %5 {offsets = [4, 0], sizes = [4, 192], strides = [1, 1]} : vector<8x192xf32> to vector<4x192xf32>
    %c1 = arith.constant 1 : index
    %c0_8 = arith.constant 0 : index
    %c0_9 = arith.constant 0 : index
    %11 = vector.load %arg12[%c1, %c0_8, %c0_9] : memref<2x4x192xf32, #tpu.memory_space<vmem>>, vector<1x4x192xf32>
    %12 = vector.shape_cast %11 : vector<1x4x192xf32> to vector<4x192xf32>
    %13 = vector.shape_cast %10 : vector<4x192xf32> to vector<1x4x192xf32>
    tpu.vector_store %arg12[%c1, %c0_8, %c0_9], %13 {strides = array<i32>} : memref<2x4x192xf32, #tpu.memory_space<vmem>>, vector<1x4x192xf32>,
    %c0_10 = arith.constant 0 : index
    %c0_11 = arith.constant 0 : index
    %14 = vector.load %arg2[%c0_10, %c0_11] : memref<64x192xf32, #tpu.memory_space<vmem>>, vector<64x192xf32>
    %c0_12 = arith.constant 0 : index
    %c0_13 = arith.constant 0 : index
    %15 = vector.load %arg5[%c0_12, %c0_13] : memref<64x192xf32, #tpu.memory_space<vmem>>, vector<64x192xf32>
    %c0_14 = arith.constant 0 : index
    %c0_15 = arith.constant 0 : index
    %16 = vector.load %arg6[%c0_14, %c0_15] : memref<64x192xf32, #tpu.memory_space<vmem>>, vector<64x192xf32>
    %c0_16 = arith.constant 0 : index
    %c0_17 = arith.constant 0 : index
    %17 = vector.load %arg7[%c0_16, %c0_17] : memref<1x192xf32, #tpu.memory_space<vmem>>, vector<1x192xf32>
    %18 = vector.shape_cast %17 : vector<1x192xf32> to vector<1x192xf32>
    %19 = vector.broadcast %18 : vector<1x192xf32> to vector<4x192xf32>
    %c0_18 = arith.constant 0 : index
    %c0_19 = arith.constant 0 : index
    %20 = vector.load %arg4[%c0_18, %c0_19] : memref<1x64xf32, #tpu.memory_space<vmem>>, vector<1x64xf32>
    %21 = vector.shape_cast %20 : vector<1x64xf32> to vector<1x64xf32>
    %22 = vector.broadcast %21 : vector<1x64xf32> to vector<4x64xf32>
    %c0_20 = arith.constant 0 : index
    %c0_21 = arith.constant 0 : index
    %23 = vector.load %arg8[%c0_20, %c0_21] : memref<1x64xf32, #tpu.memory_space<vmem>>, vector<1x64xf32>
    %24 = vector.shape_cast %23 : vector<1x64xf32> to vector<1x64xf32>
    %25 = vector.broadcast %24 : vector<1x64xf32> to vector<4x64xf32>
    %cst_22 = arith.constant 0.000000e+00 : f32
    %26 = vector.broadcast %cst_22 : f32 to vector<4x64xf32>
    %c0_i32 = arith.constant 0 : i32
    %27 = arith.index_cast %c0_i32 : i32 to index
    %c0_23 = arith.constant 0 : index
    %c0_24 = arith.constant 0 : index
    %28 = vector.load %arg12[%27, %c0_23, %c0_24] : memref<2x4x192xf32, #tpu.memory_space<vmem>>, vector<1x4x192xf32>
    %29 = vector.shape_cast %28 : vector<1x4x192xf32> to vector<4x192xf32>
    %cst_25 = arith.constant dense<0.000000e+00> : vector<4x192xf32>
    %30 = tpu.matmul %26, %14, %cst_25 {dimension_numbers = #tpu.dot_dimension_numbers<[1], [0], [0], [1], [0, 0, 1, 1], [], []>} : vector<4x64xf32>, vector<64x192xf32>, vector<4x192xf32> -> vector<4x192xf32>
    %31 = vector.extract_strided_slice %29 {offsets = [0, 0], sizes = [4, 64], strides = [1, 1]} : vector<4x192xf32> to vector<4x64xf32>
    %32 = vector.extract_strided_slice %30 {offsets = [0, 0], sizes = [4, 64], strides = [1, 1]} : vector<4x192xf32> to vector<4x64xf32>
    %33 = arith.addf %31, %32 : vector<4x64xf32>
    %34 = arith.negf %33 : vector<4x64xf32>
    %35 = math.exp %34 : vector<4x64xf32>
    %cst_26 = arith.constant 1.000000e+00 : f32
    %36 = vector.broadcast %cst_26 : f32 to vector<4x64xf32>
    %37 = arith.addf %36, %35 : vector<4x64xf32>
    %38 = arith.divf %36, %37 : vector<4x64xf32>
    %39 = vector.extract_strided_slice %29 {offsets = [0, 64], sizes = [4, 64], strides = [1, 1]} : vector<4x192xf32> to vector<4x64xf32>
    %40 = vector.extract_strided_slice %30 {offsets = [0, 64], sizes = [4, 64], strides = [1, 1]} : vector<4x192xf32> to vector<4x64xf32>
    %41 = arith.addf %39, %40 : vector<4x64xf32>
    %42 = arith.negf %41 : vector<4x64xf32>
    %43 = math.exp %42 : vector<4x64xf32>
    %cst_27 = arith.constant 1.000000e+00 : f32
    %44 = vector.broadcast %cst_27 : f32 to vector<4x64xf32>
    %45 = arith.addf %44, %43 : vector<4x64xf32>
    %46 = arith.divf %44, %45 : vector<4x64xf32>
    %47 = vector.extract_strided_slice %29 {offsets = [0, 128], sizes = [4, 64], strides = [1, 1]} : vector<4x192xf32> to vector<4x64xf32>
    %48 = vector.extract_strided_slice %30 {offsets = [0, 128], sizes = [4, 64], strides = [1, 1]} : vector<4x192xf32> to vector<4x64xf32>
    %49 = arith.addf %48, %22 : vector<4x64xf32>
    %50 = arith.mulf %38, %49 : vector<4x64xf32>
    %51 = arith.addf %47, %50 : vector<4x64xf32>
    %52 = math.tanh %51 : vector<4x64xf32>
    %cst_28 = arith.constant 1.000000e+00 : f32
    %53 = vector.broadcast %cst_28 : f32 to vector<4x64xf32>
    %54 = arith.subf %53, %46 : vector<4x64xf32>
    %55 = arith.mulf %54, %52 : vector<4x64xf32>
    %56 = arith.mulf %46, %26 : vector<4x64xf32>
    %57 = arith.addf %55, %56 : vector<4x64xf32>
    %cst_29 = arith.constant dense<0.000000e+00> : vector<4x192xf32>
    %58 = tpu.matmul %57, %15, %cst_29 {dimension_numbers = #tpu.dot_dimension_numbers<[1], [0], [0], [1], [0, 0, 1, 1], [], []>} : vector<4x64xf32>, vector<64x192xf32>, vector<4x192xf32> -> vector<4x192xf32>
    %59 = arith.addf %58, %19 : vector<4x192xf32>
    %cst_30 = arith.constant dense<0.000000e+00> : vector<4x192xf32>
    %60 = tpu.matmul %26, %16, %cst_30 {dimension_numbers = #tpu.dot_dimension_numbers<[1], [0], [0], [1], [0, 0, 1, 1], [], []>} : vector<4x64xf32>, vector<64x192xf32>, vector<4x192xf32> -> vector<4x192xf32>
    %61 = vector.extract_strided_slice %59 {offsets = [0, 0], sizes = [4, 64], strides = [1, 1]} : vector<4x192xf32> to vector<4x64xf32>
    %62 = vector.extract_strided_slice %60 {offsets = [0, 0], sizes = [4, 64], strides = [1, 1]} : vector<4x192xf32> to vector<4x64xf32>
    %63 = arith.addf %61, %62 : vector<4x64xf32>
    %64 = arith.negf %63 : vector<4x64xf32>
    %65 = math.exp %64 : vector<4x64xf32>
    %cst_31 = arith.constant 1.000000e+00 : f32
    %66 = vector.broadcast %cst_31 : f32 to vector<4x64xf32>
    %67 = arith.addf %66, %65 : vector<4x64xf32>
    %68 = arith.divf %66, %67 : vector<4x64xf32>
    %69 = vector.extract_strided_slice %59 {offsets = [0, 64], sizes = [4, 64], strides = [1, 1]} : vector<4x192xf32> to vector<4x64xf32>
    %70 = vector.extract_strided_slice %60 {offsets = [0, 64], sizes = [4, 64], strides = [1, 1]} : vector<4x192xf32> to vector<4x64xf32>
    %71 = arith.addf %69, %70 : vector<4x64xf32>
    %72 = arith.negf %71 : vector<4x64xf32>
    %73 = math.exp %72 : vector<4x64xf32>
    %cst_32 = arith.constant 1.000000e+00 : f32
    %74 = vector.broadcast %cst_32 : f32 to vector<4x64xf32>
    %75 = arith.addf %74, %73 : vector<4x64xf32>
    %76 = arith.divf %74, %75 : vector<4x64xf32>
    %77 = vector.extract_strided_slice %59 {offsets = [0, 128], sizes = [4, 64], strides = [1, 1]} : vector<4x192xf32> to vector<4x64xf32>
    %78 = vector.extract_strided_slice %60 {offsets = [0, 128], sizes = [4, 64], strides = [1, 1]} : vector<4x192xf32> to vector<4x64xf32>
    %79 = arith.addf %78, %25 : vector<4x64xf32>
    %80 = arith.mulf %68, %79 : vector<4x64xf32>
    %81 = arith.addf %77, %80 : vector<4x64xf32>
    %82 = math.tanh %81 : vector<4x64xf32>
    %cst_33 = arith.constant 1.000000e+00 : f32
    %83 = vector.broadcast %cst_33 : f32 to vector<4x64xf32>
    %84 = arith.subf %83, %76 : vector<4x64xf32>
    %85 = arith.mulf %84, %82 : vector<4x64xf32>
    %86 = arith.mulf %76, %26 : vector<4x64xf32>
    %87 = arith.addf %85, %86 : vector<4x64xf32>
    %88 = arith.index_cast %c0_i32 : i32 to index
    %c0_34 = arith.constant 0 : index
    %c0_35 = arith.constant 0 : index
    %89 = vector.load %arg13[%88, %c0_34, %c0_35] : memref<2x4x64xf32, #tpu.memory_space<vmem>>, vector<1x4x64xf32>
    %90 = vector.shape_cast %89 : vector<1x4x64xf32> to vector<4x64xf32>
    %91 = vector.shape_cast %87 : vector<4x64xf32> to vector<1x4x64xf32>
    tpu.vector_store %arg13[%88, %c0_34, %c0_35], %91 {strides = array<i32>} : memref<2x4x64xf32, #tpu.memory_space<vmem>>, vector<1x4x64xf32>,
    %c1_i32 = arith.constant 1 : i32
    %92 = arith.index_cast %c1_i32 : i32 to index
    %c0_36 = arith.constant 0 : index
    %c0_37 = arith.constant 0 : index
    %93 = vector.load %arg12[%92, %c0_36, %c0_37] : memref<2x4x192xf32, #tpu.memory_space<vmem>>, vector<1x4x192xf32>
    %94 = vector.shape_cast %93 : vector<1x4x192xf32> to vector<4x192xf32>
    %cst_38 = arith.constant dense<0.000000e+00> : vector<4x192xf32>
    %95 = tpu.matmul %57, %14, %cst_38 {dimension_numbers = #tpu.dot_dimension_numbers<[1], [0], [0], [1], [0, 0, 1, 1], [], []>} : vector<4x64xf32>, vector<64x192xf32>, vector<4x192xf32> -> vector<4x192xf32>
    %96 = vector.extract_strided_slice %94 {offsets = [0, 0], sizes = [4, 64], strides = [1, 1]} : vector<4x192xf32> to vector<4x64xf32>
    %97 = vector.extract_strided_slice %95 {offsets = [0, 0], sizes = [4, 64], strides = [1, 1]} : vector<4x192xf32> to vector<4x64xf32>
    %98 = arith.addf %96, %97 : vector<4x64xf32>
    %99 = arith.negf %98 : vector<4x64xf32>
    %100 = math.exp %99 : vector<4x64xf32>
    %cst_39 = arith.constant 1.000000e+00 : f32
    %101 = vector.broadcast %cst_39 : f32 to vector<4x64xf32>
    %102 = arith.addf %101, %100 : vector<4x64xf32>
    %103 = arith.divf %101, %102 : vector<4x64xf32>
    %104 = vector.extract_strided_slice %94 {offsets = [0, 64], sizes = [4, 64], strides = [1, 1]} : vector<4x192xf32> to vector<4x64xf32>
    %105 = vector.extract_strided_slice %95 {offsets = [0, 64], sizes = [4, 64], strides = [1, 1]} : vector<4x192xf32> to vector<4x64xf32>
    %106 = arith.addf %104, %105 : vector<4x64xf32>
    %107 = arith.negf %106 : vector<4x64xf32>
    %108 = math.exp %107 : vector<4x64xf32>
    %cst_40 = arith.constant 1.000000e+00 : f32
    %109 = vector.broadcast %cst_40 : f32 to vector<4x64xf32>
    %110 = arith.addf %109, %108 : vector<4x64xf32>
    %111 = arith.divf %109, %110 : vector<4x64xf32>
    %112 = vector.extract_strided_slice %94 {offsets = [0, 128], sizes = [4, 64], strides = [1, 1]} : vector<4x192xf32> to vector<4x64xf32>
    %113 = vector.extract_strided_slice %95 {offsets = [0, 128], sizes = [4, 64], strides = [1, 1]} : vector<4x192xf32> to vector<4x64xf32>
    %114 = arith.addf %113, %22 : vector<4x64xf32>
    %115 = arith.mulf %103, %114 : vector<4x64xf32>
    %116 = arith.addf %112, %115 : vector<4x64xf32>
    %117 = math.tanh %116 : vector<4x64xf32>
    %cst_41 = arith.constant 1.000000e+00 : f32
    %118 = vector.broadcast %cst_41 : f32 to vector<4x64xf32>
    %119 = arith.subf %118, %111 : vector<4x64xf32>
    %120 = arith.mulf %119, %117 : vector<4x64xf32>
    %121 = arith.mulf %111, %57 : vector<4x64xf32>
    %122 = arith.addf %120, %121 : vector<4x64xf32>
    %cst_42 = arith.constant dense<0.000000e+00> : vector<4x192xf32>
    %123 = tpu.matmul %122, %15, %cst_42 {dimension_numbers = #tpu.dot_dimension_numbers<[1], [0], [0], [1], [0, 0, 1, 1], [], []>} : vector<4x64xf32>, vector<64x192xf32>, vector<4x192xf32> -> vector<4x192xf32>
    %124 = arith.addf %123, %19 : vector<4x192xf32>
    %cst_43 = arith.constant dense<0.000000e+00> : vector<4x192xf32>
    %125 = tpu.matmul %87, %16, %cst_43 {dimension_numbers = #tpu.dot_dimension_numbers<[1], [0], [0], [1], [0, 0, 1, 1], [], []>} : vector<4x64xf32>, vector<64x192xf32>, vector<4x192xf32> -> vector<4x192xf32>
    %126 = vector.extract_strided_slice %124 {offsets = [0, 0], sizes = [4, 64], strides = [1, 1]} : vector<4x192xf32> to vector<4x64xf32>
    %127 = vector.extract_strided_slice %125 {offsets = [0, 0], sizes = [4, 64], strides = [1, 1]} : vector<4x192xf32> to vector<4x64xf32>
    %128 = arith.addf %126, %127 : vector<4x64xf32>
    %129 = arith.negf %128 : vector<4x64xf32>
    %130 = math.exp %129 : vector<4x64xf32>
    %cst_44 = arith.constant 1.000000e+00 : f32
    %131 = vector.broadcast %cst_44 : f32 to vector<4x64xf32>
    %132 = arith.addf %131, %130 : vector<4x64xf32>
    %133 = arith.divf %131, %132 : vector<4x64xf32>
    %134 = vector.extract_strided_slice %124 {offsets = [0, 64], sizes = [4, 64], strides = [1, 1]} : vector<4x192xf32> to vector<4x64xf32>
    %135 = vector.extract_strided_slice %125 {offsets = [0, 64], sizes = [4, 64], strides = [1, 1]} : vector<4x192xf32> to vector<4x64xf32>
    %136 = arith.addf %134, %135 : vector<4x64xf32>
    %137 = arith.negf %136 : vector<4x64xf32>
    %138 = math.exp %137 : vector<4x64xf32>
    %cst_45 = arith.constant 1.000000e+00 : f32
    %139 = vector.broadcast %cst_45 : f32 to vector<4x64xf32>
    %140 = arith.addf %139, %138 : vector<4x64xf32>
    %141 = arith.divf %139, %140 : vector<4x64xf32>
    %142 = vector.extract_strided_slice %124 {offsets = [0, 128], sizes = [4, 64], strides = [1, 1]} : vector<4x192xf32> to vector<4x64xf32>
    %143 = vector.extract_strided_slice %125 {offsets = [0, 128], sizes = [4, 64], strides = [1, 1]} : vector<4x192xf32> to vector<4x64xf32>
    %144 = arith.addf %143, %25 : vector<4x64xf32>
    %145 = arith.mulf %133, %144 : vector<4x64xf32>
    %146 = arith.addf %142, %145 : vector<4x64xf32>
    %147 = math.tanh %146 : vector<4x64xf32>
    %cst_46 = arith.constant 1.000000e+00 : f32
    %148 = vector.broadcast %cst_46 : f32 to vector<4x64xf32>
    %149 = arith.subf %148, %141 : vector<4x64xf32>
    %150 = arith.mulf %149, %147 : vector<4x64xf32>
    %151 = arith.mulf %141, %87 : vector<4x64xf32>
    %152 = arith.addf %150, %151 : vector<4x64xf32>
    %153 = arith.index_cast %c1_i32 : i32 to index
    %c0_47 = arith.constant 0 : index
    %c0_48 = arith.constant 0 : index
    %154 = vector.load %arg13[%153, %c0_47, %c0_48] : memref<2x4x64xf32, #tpu.memory_space<vmem>>, vector<1x4x64xf32>
    %155 = vector.shape_cast %154 : vector<1x4x64xf32> to vector<4x64xf32>
    %156 = vector.shape_cast %152 : vector<4x64xf32> to vector<1x4x64xf32>
    tpu.vector_store %arg13[%153, %c0_47, %c0_48], %156 {strides = array<i32>} : memref<2x4x64xf32, #tpu.memory_space<vmem>>, vector<1x4x64xf32>,
    %c2_i32 = arith.constant 2 : i32
    %c0_49 = arith.constant 0 : index
    %c0_50 = arith.constant 0 : index
    %c0_51 = arith.constant 0 : index
    %157 = vector.load %arg13[%c0_49, %c0_50, %c0_51] : memref<2x4x64xf32, #tpu.memory_space<vmem>>, vector<1x4x64xf32>
    %158 = vector.shape_cast %157 : vector<1x4x64xf32> to vector<4x64xf32>
    %c1_52 = arith.constant 1 : index
    %c0_53 = arith.constant 0 : index
    %c0_54 = arith.constant 0 : index
    %159 = vector.load %arg13[%c1_52, %c0_53, %c0_54] : memref<2x4x64xf32, #tpu.memory_space<vmem>>, vector<1x4x64xf32>
    %160 = vector.shape_cast %159 : vector<1x4x64xf32> to vector<4x64xf32>
    %161 = tpu.concatenate %158, %160 in 0 : vector<4x64xf32>, vector<4x64xf32> -> vector<8x64xf32>
    %c0_55 = arith.constant 0 : index
    %c0_56 = arith.constant 0 : index
    %162 = vector.load %arg9[%c0_55, %c0_56] : memref<64x4xf32, #tpu.memory_space<vmem>>, vector<64x4xf32>
    %cst_57 = arith.constant dense<0.000000e+00> : vector<8x4xf32>
    %163 = tpu.matmul %161, %162, %cst_57 {dimension_numbers = #tpu.dot_dimension_numbers<[1], [0], [0], [1], [0, 0, 1, 1], [], []>} : vector<8x64xf32>, vector<64x4xf32>, vector<8x4xf32> -> vector<8x4xf32>
    %c0_58 = arith.constant 0 : index
    %c0_59 = arith.constant 0 : index
    %164 = vector.load %arg10[%c0_58, %c0_59] : memref<1x4xf32, #tpu.memory_space<vmem>>, vector<1x4xf32>
    %165 = vector.broadcast %164 : vector<1x4xf32> to vector<8x4xf32>
    %166 = arith.addf %163, %165 : vector<8x4xf32>
    %c0_60 = arith.constant 0 : index
    %c0_61 = arith.constant 0 : index
    %167 = vector.load %arg11[%c0_60, %c0_61] : memref<8x4xf32, #tpu.memory_space<vmem>>, vector<8x4xf32>
    tpu.vector_store %arg11[%c0_60, %c0_61], %166 {strides = array<i32>} : memref<8x4xf32, #tpu.memory_space<vmem>>, vector<8x4xf32>,
    return
  }
}

</mosaic_0001>

<llo_original>
// kernel: tpu_custom_call.1
$region0: #{tpu_custom_call.1}
  #allocation0 [shape = 'u32[]', space=smem, size = 0x4, offset = 0x4, fixed_abs, tag = 'smem constant byte address 0x4 - core index']
  #allocation1 [shape = 'u32[144,128]{1,0:T(1,128)}', space=vmem, size = 0x12000, scoped, tag = 'internal scratch']
  #allocation2 [shape = 'f32[2,4,192]{2,1,0:T(4,128)}', space=vmem, size = 0x2000, scoped, tag = 'scratch operand']
  #allocation3 [shape = 'f32[2,4,64]{2,1,0:T(4,128)}', space=vmem, size = 0x1000, scoped, tag = 'scratch operand']
  %s0 = inlined_call_operand.vmem [shape: f32[8,16], index: 0, kind: input, shape index: {}]
  %s1 = inlined_call_operand.vmem [shape: f32[16,192], index: 1, kind: input, shape index: {}]
  %s2 = inlined_call_operand.hbm [shape: f32[64,192], index: 2, kind: input, shape index: {}]
  %s3 = inlined_call_operand.vmem [shape: f32[1,192], index: 3, kind: input, shape index: {}]
  %s4 = inlined_call_operand.vmem [shape: f32[1,64], index: 4, kind: input, shape index: {}]
  %s5 = inlined_call_operand.hbm [shape: f32[64,192], index: 5, kind: input, shape index: {}]
  %s6 = inlined_call_operand.hbm [shape: f32[64,192], index: 6, kind: input, shape index: {}]
  %s7 = inlined_call_operand.vmem [shape: f32[1,192], index: 7, kind: input, shape index: {}]
  %s8 = inlined_call_operand.vmem [shape: f32[1,64], index: 8, kind: input, shape index: {}]
  %s9 = inlined_call_operand.vmem [shape: f32[64,4], index: 9, kind: input, shape index: {}]
  %s10 = inlined_call_operand.vmem [shape: f32[1,4], index: 10, kind: input, shape index: {}]
  %s11 = inlined_call_operand.vmem [shape: f32[8,4], index: 11, kind: output, shape index: {}]
  %s12 = sld [smem:[#allocation0]]
  $region66: #{tpu_custom_call.1} parent=0
    _
  %s14 = ssub.s32 1, %s12
  %s15 = scalar_select 0, %s14, %s12
  $region1: #{tpu_custom_call.1} parent=0
    #allocation4 [shape = 'u8[65536]{0}', space=vmem, size = 0x10000, scoped, tag = 'input window, operand 2, single buffered']
    #allocation5 [shape = 's32[1]{0}', space=sflag, size = 0x4, scoped, tag = 'scoped memory for tpu_custom_call.1']
    #allocation6 [shape = 'u8[65536]{0}', space=vmem, size = 0x10000, scoped, tag = 'input window, operand 5, single buffered']
    #allocation7 [shape = 's32[1]{0}', space=sflag, size = 0x4, scoped, tag = 'scoped memory for tpu_custom_call.1']
    #allocation8 [shape = 'u8[65536]{0}', space=vmem, size = 0x10000, scoped, tag = 'input window, operand 6, single buffered']
    %16 = vsyncpa [#allocation5], 0
    %17 = vsyncpa [#allocation7], 0
    // Predicated region
    $region2: #{tpu_custom_call.1} parent=1 // pred_check
      _
    $region3: #{tpu_custom_call.1} parent=1 // pred_check_branch
      %19 = sbr.rel (0) target = $region5
    $region4: #{tpu_custom_call.1} parent=1 // pred_region
      _
    $region5: #{tpu_custom_call.1} parent=1 // pred_fallthru
      _
    // Predicated region
    $region6: #{tpu_custom_call.1} parent=1 // pred_check
      _
    $region7: #{tpu_custom_call.1} parent=1 // pred_check_branch
      %21 = sbr.rel (0) target = $region9
    $region8: #{tpu_custom_call.1} parent=1 // pred_region
      _
    $region9: #{tpu_custom_call.1} parent=1 // pred_fallthru
      _
    // Predicated region
    $region10: #{tpu_custom_call.1} parent=1 // pred_check
      _
    $region11: #{tpu_custom_call.1} parent=1 // pred_check_branch
      %23 = sbr.rel (0) target = $region13
    $region12: #{tpu_custom_call.1} parent=1 // pred_region
      %s25 = ssub.s32 2048, 2048
      %26 = vsyncadd [#allocation5], %s25
      %s27 = sshll.u32 [#allocation4], 4
      %s28 = int_to_ptr.vmem [resolvable:$true] %s27
      %33 = dma.hbm_to_vmem [thread:$0]  %s2, 2048, %s28, [#allocation5], 256, 256, 16
    $region13: #{tpu_custom_call.1} parent=1 // pred_fallthru
      _
    // Predicated region
    $region14: #{tpu_custom_call.1} parent=1 // pred_check
      _
    $region15: #{tpu_custom_call.1} parent=1 // pred_check_branch
      %35 = sbr.rel (0) target = $region17
    $region16: #{tpu_custom_call.1} parent=1 // pred_region
      _
    $region17: #{tpu_custom_call.1} parent=1 // pred_fallthru
      _
    // Predicated region
    $region18: #{tpu_custom_call.1} parent=1 // pred_check
      _
    $region19: #{tpu_custom_call.1} parent=1 // pred_check_branch
      %37 = sbr.rel (0) target = $region21
    $region20: #{tpu_custom_call.1} parent=1 // pred_region
      _
    $region21: #{tpu_custom_call.1} parent=1 // pred_fallthru
      _
    // Predicated region
    $region22: #{tpu_custom_call.1} parent=1 // pred_check
      _
    $region23: #{tpu_custom_call.1} parent=1 // pred_check_branch
      %39 = sbr.rel (0) target = $region25
    $region24: #{tpu_custom_call.1} parent=1 // pred_region
      %s41 = ssub.s32 2048, 2048
      %42 = vsyncadd [#allocation7], %s41
      %s43 = sshll.u32 [#allocation6], 4
      %s44 = int_to_ptr.vmem [resolvable:$true] %s43
      %49 = dma.hbm_to_vmem [thread:$0]  %s5, 2048, %s44, [#allocation7], 256, 256, 16
    $region25: #{tpu_custom_call.1} parent=1 // pred_fallthru
      _
    // Predicated region
    $region26: #{tpu_custom_call.1} parent=1 // pred_check
      _
    $region27: #{tpu_custom_call.1} parent=1 // pred_check_branch
      %51 = sbr.rel (0) target = $region29
    $region28: #{tpu_custom_call.1} parent=1 // pred_region
      %s53 = ssub.s32 2048, 2048
      %54 = vsyncadd [#allocation7], %s53
      %s55 = sshll.u32 [#allocation8], 4
      %s56 = int_to_ptr.vmem [resolvable:$true] %s55
      %61 = dma.hbm_to_vmem [thread:$0]  %s6, 2048, %s56, [#allocation7], 256, 256, 16
    $region29: #{tpu_custom_call.1} parent=1 // pred_fallthru
      _
    // Predicated region
    $region30: #{tpu_custom_call.1} parent=1 // pred_check
      _
    $region31: #{tpu_custom_call.1} parent=1 // pred_check_branch
      %63 = sbr.rel (0) target = $region33
    $region32: #{tpu_custom_call.1} parent=1 // pred_region
      _
    $region33: #{tpu_custom_call.1} parent=1 // pred_fallthru
      _
    // Predicated region
    $region34: #{tpu_custom_call.1} parent=1 // pred_check
      _
    $region35: #{tpu_custom_call.1} parent=1 // pred_check_branch
      %65 = sbr.rel (0) target = $region37
    $region36: #{tpu_custom_call.1} parent=1 // pred_region
      _
    $region37: #{tpu_custom_call.1} parent=1 // pred_fallthru
      _
    // Predicated region
    $region38: #{tpu_custom_call.1} parent=1 // pred_check
      _
    $region39: #{tpu_custom_call.1} parent=1 // pred_check_branch
      %67 = sbr.rel (0) target = $region41
    $region40: #{tpu_custom_call.1} parent=1 // pred_region
      _
    $region41: #{tpu_custom_call.1} parent=1 // pred_fallthru
      _
    // Predicated region
    $region42: #{tpu_custom_call.1} parent=1 // pred_check
      _
    $region43: #{tpu_custom_call.1} parent=1 // pred_check_branch
      %69 = sbr.rel (0) target = $region45
    $region44: #{tpu_custom_call.1} parent=1 // pred_region
      _
    $region45: #{tpu_custom_call.1} parent=1 // pred_fallthru
      _
    // Predicated region
    $region46: #{tpu_custom_call.1} parent=1 // pred_check
      _
    $region47: #{tpu_custom_call.1} parent=1 // pred_check_branch
      %71 = sbr.rel (0) target = $region49
    $region48: #{tpu_custom_call.1} parent=1 // pred_region
      %72 = dma.done [#allocation5], 2048
    $region49: #{tpu_custom_call.1} parent=1 // pred_fallthru
      _
    // Predicated region
    $region50: #{tpu_custom_call.1} parent=1 // pred_check
      _
    $region51: #{tpu_custom_call.1} parent=1 // pred_check_branch
      %74 = sbr.rel (0) target = $region53
    $region52: #{tpu_custom_call.1} parent=1 // pred_region
      %75 = dma.done [#allocation7], 2048
    $region53: #{tpu_custom_call.1} parent=1 // pred_fallthru
      _
    // Predicated region
    $region54: #{tpu_custom_call.1} parent=1 // pred_check
      _
    $region55: #{tpu_custom_call.1} parent=1 // pred_check_branch
      %77 = sbr.rel (0) target = $region57
    $region56: #{tpu_custom_call.1} parent=1 // pred_region
      %78 = dma.done [#allocation7], 2048
    $region57: #{tpu_custom_call.1} parent=1 // pred_fallthru
      _
    %v79 = vld [vmem:[%s0] sm:$0xff]
    %v80 = vld [vmem:[%s1] sm:$0xff]
    %v81 = vld [vmem:[%s1 + $0x8] sm:$0xff]
    %v82 = vld [vmem:[%s1 + $0x10] sm:$0xff]
    %v83 = vld [vmem:[%s1 + $0x18] sm:$0xff]
    %v84 = vld [vmem:[%s3] sm:$0x3]
    %v86 = vlaneseq
    %v87 = vshrl.u32 %v86, 7
    %v88 = vsub.s32 0, %v87
    %v89 = vrot.slane %v84, %v88
    %v90 = vlaneseq
    %v91 = vshrl.u32 %v90, 7
    %v92 = vsub.s32 1, %v91
    %v93 = vrot.slane %v84, %v92
    %vm96 = vcmask 130048
    %v98 = vsel %vm96, %v79, 0
    %100 = vmatprep.subr.mxu0 %v81
    %101 = vmatpush1.msra.mxu0 %v80
    %102 = vmatprep.subr.mxu0 %v83
    %103 = vmatpush1.msra.mxu0 %v82
    %104 = vmatprep.subr.mxu0 0.0
    %105 = vmatpush1.msra.mxu0 0.0
    %106 = vmatprep.subr.mxu0 0.0
    %107 = vmatpush1.msra.mxu0 0.0
    %108 = vmatprep.subr.mxu0 0.0
    %109 = vmatpush1.msra.mxu0 0.0
    %110 = vmatprep.subr.mxu0 0.0
    %111 = vmatpush1.msra.mxu0 0.0
    %112 = vmatprep.subr.mxu0 0.0
    %113 = vmatpush1.msra.mxu0 0.0
    %114 = vmatprep.subr.mxu0 0.0
    %115 = vmatpush1.msra.mxu0 0.0
    %116 = vmatprep.subr.mxu0 0.0
    %117 = vmatpush1.msra.mxu0 0.0
    %118 = vmatprep.subr.mxu0 0.0
    %119 = vmatpush1.msra.mxu0 0.0
    %120 = vmatprep.subr.mxu0 0.0
    %121 = vmatpush1.msra.mxu0 0.0
    %122 = vmatprep.subr.mxu0 0.0
    %123 = vmatpush1.msra.mxu0 0.0
    %124 = vmatprep.subr.mxu0 0.0
    %125 = vmatpush1.msra.mxu0 0.0
    %126 = vmatprep.subr.mxu0 0.0
    %127 = vmatpush1.msra.mxu0 0.0
    %128 = vmatprep.subr.mxu0 0.0
    %129 = vmatpush1.msra.mxu0 0.0
    %130 = vmatprep.subr.mxu0 0.0
    %131 = vmatpush1.msra.mxu0 0.0
    %132 = vmatprep.subr.mxu0 0.0
    %133 = vmatpush1.msra.mxu0 0.0
    %134 = vmatprep.subr.mxu0 0.0
    %135 = vmatpush1.msra.mxu0 0.0
    %136 = vmatprep.subr.mxu0 0.0
    %137 = vmatpush1.msra.mxu0 0.0
    %138 = vmatprep.subr.mxu0 0.0
    %139 = vmatpush1.msra.mxu0 0.0
    %140 = vmatprep.subr.mxu0 0.0
    %141 = vmatpush1.msra.mxu0 0.0
    %142 = vmatprep.subr.mxu0 0.0
    %143 = vmatpush1.msra.mxu0 0.0
    %144 = vmatprep.subr.mxu0 0.0
    %145 = vmatpush1.msra.mxu0 0.0
    %146 = vmatprep.subr.mxu0 0.0
    %147 = vmatpush1.msra.mxu0 0.0
    %148 = vmatprep.subr.mxu0 0.0
    %149 = vmatpush1.msra.mxu0 0.0
    %150 = vmatprep.subr.mxu0 0.0
    %151 = vmatpush1.msra.mxu0 0.0
    %152 = vmatprep.subr.mxu0 0.0
    %153 = vmatpush1.msra.mxu0 0.0
    %154 = vmatprep.subr.mxu0 0.0
    %155 = vmatpush1.msra.mxu0 0.0
    %156 = vmatprep.subr.mxu0 0.0
    %157 = vmatpush1.msra.mxu0 0.0
    %158 = vmatprep.subr.mxu0 0.0
    %159 = vmatpush1.msra.mxu0 0.0
    %160 = vmatprep.subr.mxu0 0.0
    %161 = vmatpush1.msra.mxu0 0.0
    %162 = vmatprep.subr.mxu0 0.0
    %163 = vmatpush1.msra.mxu0 0.0
    %164 = vmatprep.mubr.f32.mxu0 0.0
    %165 = vmatmul.mubr.f32.gmra.mrb[0].mxu0 %v98
    %v166 = vpop.f32.mrb[0].mxu0
    %v167 = vadd.f32 %v89, %v166
    %v168 = vpop.f32.mrb[0].mxu0
    %v169 = vadd.f32 %v93, %v168
    %170 = vdwg.mxu0
    %v173 = vcombine.low %v167, %v169
    %vm175 = vcmask 1043456
    %vm176 = vcmask 523268
    %vm177 = vmor %vm176, %vm175
    %178 = vst.msk [vmem:[#allocation2] sm:$0xff] %vm177, %v173
    %v179 = vcombine.high %v167, %v169
    %s181 = scalar_lea.vmem [#allocation2], 8
    %182 = vst.msk [vmem:[%s181] sm:$0xff] %vm177, %v179
    %v183 = vld [vmem:[#allocation4] sm:$0xff]
    %v184 = vld [vmem:[#allocation4 + $0x8] sm:$0xff]
    %v185 = vld [vmem:[#allocation4 + $0x10] sm:$0xff]
    %v186 = vld [vmem:[#allocation4 + $0x18] sm:$0xff]
    %v187 = vld [vmem:[#allocation4 + $0x20] sm:$0xff]
    %v188 = vld [vmem:[#allocation4 + $0x28] sm:$0xff]
    %v189 = vld [vmem:[#allocation4 + $0x30] sm:$0xff]
    %v190 = vld [vmem:[#allocation4 + $0x38] sm:$0xff]
    %v191 = vld [vmem:[#allocation4 + $0x40] sm:$0xff]
    %v192 = vld [vmem:[#allocation4 + $0x48] sm:$0xff]
    %v193 = vld [vmem:[#allocation4 + $0x50] sm:$0xff]
    %v194 = vld [vmem:[#allocation4 + $0x58] sm:$0xff]
    %v195 = vld [vmem:[#allocation4 + $0x60] sm:$0xff]
    %v196 = vld [vmem:[#allocation4 + $0x68] sm:$0xff]
    %v197 = vld [vmem:[#allocation4 + $0x70] sm:$0xff]
    %v198 = vld [vmem:[#allocation4 + $0x78] sm:$0xff]
    %v199 = vld [vmem:[#allocation6] sm:$0xff]
    %v200 = vld [vmem:[#allocation6 + $0x8] sm:$0xff]
    %v201 = vld [vmem:[#allocation6 + $0x10] sm:$0xff]
    %v202 = vld [vmem:[#allocation6 + $0x18] sm:$0xff]
    %v203 = vld [vmem:[#allocation6 + $0x20] sm:$0xff]
    %v204 = vld [vmem:[#allocation6 + $0x28] sm:$0xff]
    %v205 = vld [vmem:[#allocation6 + $0x30] sm:$0xff]
    %v206 = vld [vmem:[#allocation6 + $0x38] sm:$0xff]
    %v207 = vld [vmem:[#allocation6 + $0x40] sm:$0xff]
    %v208 = vld [vmem:[#allocation6 + $0x48] sm:$0xff]
    %v209 = vld [vmem:[#allocation6 + $0x50] sm:$0xff]
    %v210 = vld [vmem:[#allocation6 + $0x58] sm:$0xff]
    %v211 = vld [vmem:[#allocation6 + $0x60] sm:$0xff]
    %v212 = vld [vmem:[#allocation6 + $0x68] sm:$0xff]
    %v213 = vld [vmem:[#allocation6 + $0x70] sm:$0xff]
    %v214 = vld [vmem:[#allocation6 + $0x78] sm:$0xff]
    %v215 = vld [vmem:[#allocation8] sm:$0xff]
    %v216 = vld [vmem:[#allocation8 + $0x8] sm:$0xff]
    %v217 = vld [vmem:[#allocation8 + $0x10] sm:$0xff]
    %v218 = vld [vmem:[#allocation8 + $0x18] sm:$0xff]
    %v219 = vld [vmem:[#allocation8 + $0x20] sm:$0xff]
    %v220 = vld [vmem:[#allocation8 + $0x28] sm:$0xff]
    %v221 = vld [vmem:[#allocation8 + $0x30] sm:$0xff]
    %v222 = vld [vmem:[#allocation8 + $0x38] sm:$0xff]
    %v223 = vld [vmem:[#allocation8 + $0x40] sm:$0xff]
    %v224 = vld [vmem:[#allocation8 + $0x48] sm:$0xff]
    %v225 = vld [vmem:[#allocation8 + $0x50] sm:$0xff]
    %v226 = vld [vmem:[#allocation8 + $0x58] sm:$0xff]
    %v227 = vld [vmem:[#allocation8 + $0x60] sm:$0xff]
    %v228 = vld [vmem:[#allocation8 + $0x68] sm:$0xff]
    %v229 = vld [vmem:[#allocation8 + $0x70] sm:$0xff]
    %v230 = vld [vmem:[#allocation8 + $0x78] sm:$0xff]
    %v231 = vld [vmem:[%s7] sm:$0x3]
    %v233 = vlaneseq
    %v234 = vshrl.u32 %v233, 7
    %v235 = vsub.s32 0, %v234
    %v236 = vrot.slane %v231, %v235
    %v237 = vlaneseq
    %v238 = vshrl.u32 %v237, 7
    %v239 = vsub.s32 1, %v238
    %v240 = vrot.slane %v231, %v239
    %v243 = vld [vmem:[%s4] sm:$0x1]
    %v245 = vlaneseq
    %v246 = vshrl.u32 %v245, 7
    %v247 = vsub.s32 0, %v246
    %v248 = vrot.slane %v243, %v247
    %v250 = vld [vmem:[%s8] sm:$0x1]
    %v252 = vlaneseq
    %v253 = vshrl.u32 %v252, 7
    %v254 = vsub.s32 0, %v253
    %v255 = vrot.slane %v250, %v254
    %v257 = vld [vmem:[#allocation2] sm:$0xff]
    %vm258 = vcmask 523264
    %v260 = vsel %vm258, 0.0, 0
    %262 = vmatprep.subr.mxu0 %v184
    %263 = vmatpush1.msra.mxu0 %v183
    %264 = vmatprep.subr.mxu0 %v186
    %265 = vmatpush1.msra.mxu0 %v185
    %266 = vmatprep.subr.mxu0 %v188
    %267 = vmatpush1.msra.mxu0 %v187
    %268 = vmatprep.subr.mxu0 %v190
    %269 = vmatpush1.msra.mxu0 %v189
    %270 = vmatprep.subr.mxu0 %v192
    %271 = vmatpush1.msra.mxu0 %v191
    %272 = vmatprep.subr.mxu0 %v194
    %273 = vmatpush1.msra.mxu0 %v193
    %274 = vmatprep.subr.mxu0 %v196
    %275 = vmatpush1.msra.mxu0 %v195
    %276 = vmatprep.subr.mxu0 %v198
    %277 = vmatpush1.msra.mxu0 %v197
    %278 = vmatprep.subr.mxu0 0.0
    %279 = vmatpush1.msra.mxu0 0.0
    %280 = vmatprep.subr.mxu0 0.0
    %281 = vmatpush1.msra.mxu0 0.0
    %282 = vmatprep.subr.mxu0 0.0
    %283 = vmatpush1.msra.mxu0 0.0
    %284 = vmatprep.subr.mxu0 0.0
    %285 = vmatpush1.msra.mxu0 0.0
    %286 = vmatprep.subr.mxu0 0.0
    %287 = vmatpush1.msra.mxu0 0.0
    %288 = vmatprep.subr.mxu0 0.0
    %289 = vmatpush1.msra.mxu0 0.0
    %290 = vmatprep.subr.mxu0 0.0
    %291 = vmatpush1.msra.mxu0 0.0
    %292 = vmatprep.subr.mxu0 0.0
    %293 = vmatpush1.msra.mxu0 0.0
    %294 = vmatprep.subr.mxu0 0.0
    %295 = vmatpush1.msra.mxu0 0.0
    %296 = vmatprep.subr.mxu0 0.0
    %297 = vmatpush1.msra.mxu0 0.0
    %298 = vmatprep.subr.mxu0 0.0
    %299 = vmatpush1.msra.mxu0 0.0
    %300 = vmatprep.subr.mxu0 0.0
    %301 = vmatpush1.msra.mxu0 0.0
    %302 = vmatprep.subr.mxu0 0.0
    %303 = vmatpush1.msra.mxu0 0.0
    %304 = vmatprep.subr.mxu0 0.0
    %305 = vmatpush1.msra.mxu0 0.0
    %306 = vmatprep.subr.mxu0 0.0
    %307 = vmatpush1.msra.mxu0 0.0
    %308 = vmatprep.subr.mxu0 0.0
    %309 = vmatpush1.msra.mxu0 0.0
    %310 = vmatprep.subr.mxu0 0.0
    %311 = vmatpush1.msra.mxu0 0.0
    %312 = vmatprep.subr.mxu0 0.0
    %313 = vmatpush1.msra.mxu0 0.0
    %314 = vmatprep.subr.mxu0 0.0
    %315 = vmatpush1.msra.mxu0 0.0
    %316 = vmatprep.subr.mxu0 0.0
    %317 = vmatpush1.msra.mxu0 0.0
    %318 = vmatprep.subr.mxu0 0.0
    %319 = vmatpush1.msra.mxu0 0.0
    %320 = vmatprep.subr.mxu0 0.0
    %321 = vmatpush1.msra.mxu0 0.0
    %322 = vmatprep.subr.mxu0 0.0
    %323 = vmatpush1.msra.mxu0 0.0
    %324 = vmatprep.subr.mxu0 0.0
    %325 = vmatpush1.msra.mxu0 0.0
    %326 = vmatprep.mubr.f32.mxu0 0.0
    %327 = vmatmul.mubr.f32.gmra.mrb[0].mxu0 %v260
    %v328 = vpop.f32.mrb[0].mxu0
    %v329 = vadd.f32 0.0, %v328
    %v330 = vpop.f32.mrb[0].mxu0
    %v331 = vadd.f32 0.0, %v330
    %332 = vdwg.mxu0
    %v333 = vadd.f32 %v257, %v329
    %v334 = vxor.u32 %v333, 2147483648
    %v335 = vmul.f32 %v334, 1.442695
    %v336 = vpow.pop %v335
    %v337 = vadd.f32 %v336, 1.0
    %v338 = vrcp.pop %v337
    %v339 = vmul.f32 1.0, %v338
    %v340 = vadd.f32 %v331, %v248
    %v341 = vmul.f32 %v339, %v340
    %v343 = vrot.slane %v257, 4
    %v345 = vadd.f32 %v343, %v341
    %v346 = vtanh.pop %v345
    %v347 = vsub.f32 1.0, %v339
    %349 = vrot.lane.b32.xlu0 %v346, 64
    %v350 = vpop.permute.xlu0 %349
    %v352 = vmul.f32 %v347, %v350
    %v353 = vmul.f32 %v339, 0.0
    %v354 = vadd.f32 %v352, %v353
    %356 = vrot.lane.b32.xlu0 %v354, 64
    %v357 = vpop.permute.xlu0 %356
    %v358 = vsel %vm258, %v357, 0
    %360 = vmatprep.subr.mxu0 %v200
    %361 = vmatpush1.msra.mxu0 %v199
    %362 = vmatprep.subr.mxu0 %v202
    %363 = vmatpush1.msra.mxu0 %v201
    %364 = vmatprep.subr.mxu0 %v204
    %365 = vmatpush1.msra.mxu0 %v203
    %366 = vmatprep.subr.mxu0 %v206
    %367 = vmatpush1.msra.mxu0 %v205
    %368 = vmatprep.subr.mxu0 %v208
    %369 = vmatpush1.msra.mxu0 %v207
    %370 = vmatprep.subr.mxu0 %v210
    %371 = vmatpush1.msra.mxu0 %v209
    %372 = vmatprep.subr.mxu0 %v212
    %373 = vmatpush1.msra.mxu0 %v211
    %374 = vmatprep.subr.mxu0 %v214
    %375 = vmatpush1.msra.mxu0 %v213
    %376 = vmatprep.subr.mxu0 0.0
    %377 = vmatpush1.msra.mxu0 0.0
    %378 = vmatprep.subr.mxu0 0.0
    %379 = vmatpush1.msra.mxu0 0.0
    %380 = vmatprep.subr.mxu0 0.0
    %381 = vmatpush1.msra.mxu0 0.0
    %382 = vmatprep.subr.mxu0 0.0
    %383 = vmatpush1.msra.mxu0 0.0
    %384 = vmatprep.subr.mxu0 0.0
    %385 = vmatpush1.msra.mxu0 0.0
    %386 = vmatprep.subr.mxu0 0.0
    %387 = vmatpush1.msra.mxu0 0.0
    %388 = vmatprep.subr.mxu0 0.0
    %389 = vmatpush1.msra.mxu0 0.0
    %390 = vmatprep.subr.mxu0 0.0
    %391 = vmatpush1.msra.mxu0 0.0
    %392 = vmatprep.subr.mxu0 0.0
    %393 = vmatpush1.msra.mxu0 0.0
    %394 = vmatprep.subr.mxu0 0.0
    %395 = vmatpush1.msra.mxu0 0.0
    %396 = vmatprep.subr.mxu0 0.0
    %397 = vmatpush1.msra.mxu0 0.0
    %398 = vmatprep.subr.mxu0 0.0
    %399 = vmatpush1.msra.mxu0 0.0
    %400 = vmatprep.subr.mxu0 0.0
    %401 = vmatpush1.msra.mxu0 0.0
    %402 = vmatprep.subr.mxu0 0.0
    %403 = vmatpush1.msra.mxu0 0.0
    %404 = vmatprep.subr.mxu0 0.0
    %405 = vmatpush1.msra.mxu0 0.0
    %406 = vmatprep.subr.mxu0 0.0
    %407 = vmatpush1.msra.mxu0 0.0
    %408 = vmatprep.subr.mxu0 0.0
    %409 = vmatpush1.msra.mxu0 0.0
    %410 = vmatprep.subr.mxu0 0.0
    %411 = vmatpush1.msra.mxu0 0.0
    %412 = vmatprep.subr.mxu0 0.0
    %413 = vmatpush1.msra.mxu0 0.0
    %414 = vmatprep.subr.mxu0 0.0
    %415 = vmatpush1.msra.mxu0 0.0
    %416 = vmatprep.subr.mxu0 0.0
    %417 = vmatpush1.msra.mxu0 0.0
    %418 = vmatprep.subr.mxu0 0.0
    %419 = vmatpush1.msra.mxu0 0.0
    %420 = vmatprep.subr.mxu0 0.0
    %421 = vmatpush1.msra.mxu0 0.0
    %422 = vmatprep.subr.mxu0 0.0
    %423 = vmatpush1.msra.mxu0 0.0
    %424 = vmatprep.mubr.f32.mxu0 0.0
    %425 = vmatmul.mubr.f32.gmra.mrb[0].mxu0 %v358
    %v426 = vpop.f32.mrb[0].mxu0
    %v427 = vadd.f32 %v236, %v426
    %v428 = vpop.f32.mrb[0].mxu0
    %v429 = vadd.f32 %v240, %v428
    %430 = vdwg.mxu0
    %431 = vmatprep.subr.mxu0 %v216
    %432 = vmatpush1.msra.mxu0 %v215
    %433 = vmatprep.subr.mxu0 %v218
    %434 = vmatpush1.msra.mxu0 %v217
    %435 = vmatprep.subr.mxu0 %v220
    %436 = vmatpush1.msra.mxu0 %v219
    %437 = vmatprep.subr.mxu0 %v222
    %438 = vmatpush1.msra.mxu0 %v221
    %439 = vmatprep.subr.mxu0 %v224
    %440 = vmatpush1.msra.mxu0 %v223
    %441 = vmatprep.subr.mxu0 %v226
    %442 = vmatpush1.msra.mxu0 %v225
    %443 = vmatprep.subr.mxu0 %v228
    %444 = vmatpush1.msra.mxu0 %v227
    %445 = vmatprep.subr.mxu0 %v230
    %446 = vmatpush1.msra.mxu0 %v229
    %447 = vmatprep.subr.mxu0 0.0
    %448 = vmatpush1.msra.mxu0 0.0
    %449 = vmatprep.subr.mxu0 0.0
    %450 = vmatpush1.msra.mxu0 0.0
    %451 = vmatprep.subr.mxu0 0.0
    %452 = vmatpush1.msra.mxu0 0.0
    %453 = vmatprep.subr.mxu0 0.0
    %454 = vmatpush1.msra.mxu0 0.0
    %455 = vmatprep.subr.mxu0 0.0
    %456 = vmatpush1.msra.mxu0 0.0
    %457 = vmatprep.subr.mxu0 0.0
    %458 = vmatpush1.msra.mxu0 0.0
    %459 = vmatprep.subr.mxu0 0.0
    %460 = vmatpush1.msra.mxu0 0.0
    %461 = vmatprep.subr.mxu0 0.0
    %462 = vmatpush1.msra.mxu0 0.0
    %463 = vmatprep.subr.mxu0 0.0
    %464 = vmatpush1.msra.mxu0 0.0
    %465 = vmatprep.subr.mxu0 0.0
    %466 = vmatpush1.msra.mxu0 0.0
    %467 = vmatprep.subr.mxu0 0.0
    %468 = vmatpush1.msra.mxu0 0.0
    %469 = vmatprep.subr.mxu0 0.0
    %470 = vmatpush1.msra.mxu0 0.0
    %471 = vmatprep.subr.mxu0 0.0
    %472 = vmatpush1.msra.mxu0 0.0
    %473 = vmatprep.subr.mxu0 0.0
    %474 = vmatpush1.msra.mxu0 0.0
    %475 = vmatprep.subr.mxu0 0.0
    %476 = vmatpush1.msra.mxu0 0.0
    %477 = vmatprep.subr.mxu0 0.0
    %478 = vmatpush1.msra.mxu0 0.0
    %479 = vmatprep.subr.mxu0 0.0
    %480 = vmatpush1.msra.mxu0 0.0
    %481 = vmatprep.subr.mxu0 0.0
    %482 = vmatpush1.msra.mxu0 0.0
    %483 = vmatprep.subr.mxu0 0.0
    %484 = vmatpush1.msra.mxu0 0.0
    %485 = vmatprep.subr.mxu0 0.0
    %486 = vmatpush1.msra.mxu0 0.0
    %487 = vmatprep.subr.mxu0 0.0
    %488 = vmatpush1.msra.mxu0 0.0
    %489 = vmatprep.subr.mxu0 0.0
    %490 = vmatpush1.msra.mxu0 0.0
    %491 = vmatprep.subr.mxu0 0.0
    %492 = vmatpush1.msra.mxu0 0.0
    %493 = vmatprep.subr.mxu0 0.0
    %494 = vmatpush1.msra.mxu0 0.0
    %495 = vmatprep.mubr.f32.mxu0 0.0
    %496 = vmatmul.mubr.f32.gmra.mrb[0].mxu0 %v260
    %v497 = vpop.f32.mrb[0].mxu0
    %v498 = vadd.f32 0.0, %v497
    %v499 = vpop.f32.mrb[0].mxu0
    %v500 = vadd.f32 0.0, %v499
    %501 = vdwg.mxu0
    %v502 = vadd.f32 %v427, %v498
    %v503 = vxor.u32 %v502, 2147483648
    %v504 = vmul.f32 %v503, 1.442695
    %v505 = vpow.pop %v504
    %v506 = vadd.f32 %v505, 1.0
    %v507 = vrcp.pop %v506
    %v508 = vmul.f32 1.0, %v507
    %v509 = vadd.f32 %v500, %v255
    %v510 = vmul.f32 %v508, %v509
    %v511 = vadd.f32 %v429, %v510
    %v512 = vtanh.pop %v511
    %v513 = vsub.f32 1.0, %v508
    %515 = vrot.lane.b32.xlu0 %v512, 64
    %v516 = vpop.permute.xlu0 %515
    %v518 = vmul.f32 %v513, %v516
    %v519 = vmul.f32 %v508, 0.0
    %v520 = vadd.f32 %v518, %v519
    %522 = vrot.lane.b32.xlu0 %v520, 64
    %v523 = vpop.permute.xlu0 %522
    %vm525 = vcmask 519168
    %526 = vst.msk [vmem:[#allocation3] sm:$0xf] %vm525, %v523
    %v527 = vld [vmem:[%s181] sm:$0xff]
    %528 = vmatprep.subr.mxu0 %v184
    %529 = vmatpush1.msra.mxu0 %v183
    %530 = vmatprep.subr.mxu0 %v186
    %531 = vmatpush1.msra.mxu0 %v185
    %532 = vmatprep.subr.mxu0 %v188
    %533 = vmatpush1.msra.mxu0 %v187
    %534 = vmatprep.subr.mxu0 %v190
    %535 = vmatpush1.msra.mxu0 %v189
    %536 = vmatprep.subr.mxu0 %v192
    %537 = vmatpush1.msra.mxu0 %v191
    %538 = vmatprep.subr.mxu0 %v194
    %539 = vmatpush1.msra.mxu0 %v193
    %540 = vmatprep.subr.mxu0 %v196
    %541 = vmatpush1.msra.mxu0 %v195
    %542 = vmatprep.subr.mxu0 %v198
    %543 = vmatpush1.msra.mxu0 %v197
    %544 = vmatprep.subr.mxu0 0.0
    %545 = vmatpush1.msra.mxu0 0.0
    %546 = vmatprep.subr.mxu0 0.0
    %547 = vmatpush1.msra.mxu0 0.0
    %548 = vmatprep.subr.mxu0 0.0
    %549 = vmatpush1.msra.mxu0 0.0
    %550 = vmatprep.subr.mxu0 0.0
    %551 = vmatpush1.msra.mxu0 0.0
    %552 = vmatprep.subr.mxu0 0.0
    %553 = vmatpush1.msra.mxu0 0.0
    %554 = vmatprep.subr.mxu0 0.0
    %555 = vmatpush1.msra.mxu0 0.0
    %556 = vmatprep.subr.mxu0 0.0
    %557 = vmatpush1.msra.mxu0 0.0
    %558 = vmatprep.subr.mxu0 0.0
    %559 = vmatpush1.msra.mxu0 0.0
    %560 = vmatprep.subr.mxu0 0.0
    %561 = vmatpush1.msra.mxu0 0.0
    %562 = vmatprep.subr.mxu0 0.0
    %563 = vmatpush1.msra.mxu0 0.0
    %564 = vmatprep.subr.mxu0 0.0
    %565 = vmatpush1.msra.mxu0 0.0
    %566 = vmatprep.subr.mxu0 0.0
    %567 = vmatpush1.msra.mxu0 0.0
    %568 = vmatprep.subr.mxu0 0.0
    %569 = vmatpush1.msra.mxu0 0.0
    %570 = vmatprep.subr.mxu0 0.0
    %571 = vmatpush1.msra.mxu0 0.0
    %572 = vmatprep.subr.mxu0 0.0
    %573 = vmatpush1.msra.mxu0 0.0
    %574 = vmatprep.subr.mxu0 0.0
    %575 = vmatpush1.msra.mxu0 0.0
    %576 = vmatprep.subr.mxu0 0.0
    %577 = vmatpush1.msra.mxu0 0.0
    %578 = vmatprep.subr.mxu0 0.0
    %579 = vmatpush1.msra.mxu0 0.0
    %580 = vmatprep.subr.mxu0 0.0
    %581 = vmatpush1.msra.mxu0 0.0
    %582 = vmatprep.subr.mxu0 0.0
    %583 = vmatpush1.msra.mxu0 0.0
    %584 = vmatprep.subr.mxu0 0.0
    %585 = vmatpush1.msra.mxu0 0.0
    %586 = vmatprep.subr.mxu0 0.0
    %587 = vmatpush1.msra.mxu0 0.0
    %588 = vmatprep.subr.mxu0 0.0
    %589 = vmatpush1.msra.mxu0 0.0
    %590 = vmatprep.subr.mxu0 0.0
    %591 = vmatpush1.msra.mxu0 0.0
    %592 = vmatprep.mubr.f32.mxu0 0.0
    %593 = vmatmul.mubr.f32.gmra.mrb[0].mxu0 %v358
    %v594 = vpop.f32.mrb[0].mxu0
    %v595 = vadd.f32 0.0, %v594
    %v596 = vpop.f32.mrb[0].mxu0
    %v597 = vadd.f32 0.0, %v596
    %598 = vdwg.mxu0
    %v599 = vadd.f32 %v527, %v595
    %v600 = vxor.u32 %v599, 2147483648
    %v601 = vmul.f32 %v600, 1.442695
    %v602 = vpow.pop %v601
    %v603 = vadd.f32 %v602, 1.0
    %v604 = vrcp.pop %v603
    %v605 = vmul.f32 1.0, %v604
    %v606 = vadd.f32 %v597, %v248
    %v607 = vmul.f32 %v605, %v606
    %v609 = vrot.slane %v527, 4
    %v611 = vadd.f32 %v609, %v607
    %v612 = vtanh.pop %v611
    %v613 = vsub.f32 1.0, %v605
    %615 = vrot.lane.b32.xlu0 %v612, 64
    %v616 = vpop.permute.xlu0 %615
    %v618 = vmul.f32 %v613, %v616
    %v619 = vmul.f32 %v605, %v354
    %v620 = vadd.f32 %v618, %v619
    %622 = vrot.lane.b32.xlu0 %v620, 64
    %v623 = vpop.permute.xlu0 %622
    %v624 = vsel %vm258, %v623, 0
    %626 = vmatprep.subr.mxu0 %v200
    %627 = vmatpush1.msra.mxu0 %v199
    %628 = vmatprep.subr.mxu0 %v202
    %629 = vmatpush1.msra.mxu0 %v201
    %630 = vmatprep.subr.mxu0 %v204
    %631 = vmatpush1.msra.mxu0 %v203
    %632 = vmatprep.subr.mxu0 %v206
    %633 = vmatpush1.msra.mxu0 %v205
    %634 = vmatprep.subr.mxu0 %v208
    %635 = vmatpush1.msra.mxu0 %v207
    %636 = vmatprep.subr.mxu0 %v210
    %637 = vmatpush1.msra.mxu0 %v209
    %638 = vmatprep.subr.mxu0 %v212
    %639 = vmatpush1.msra.mxu0 %v211
    %640 = vmatprep.subr.mxu0 %v214
    %641 = vmatpush1.msra.mxu0 %v213
    %642 = vmatprep.subr.mxu0 0.0
    %643 = vmatpush1.msra.mxu0 0.0
    %644 = vmatprep.subr.mxu0 0.0
    %645 = vmatpush1.msra.mxu0 0.0
    %646 = vmatprep.subr.mxu0 0.0
    %647 = vmatpush1.msra.mxu0 0.0
    %648 = vmatprep.subr.mxu0 0.0
    %649 = vmatpush1.msra.mxu0 0.0
    %650 = vmatprep.subr.mxu0 0.0
    %651 = vmatpush1.msra.mxu0 0.0
    %652 = vmatprep.subr.mxu0 0.0
    %653 = vmatpush1.msra.mxu0 0.0
    %654 = vmatprep.subr.mxu0 0.0
    %655 = vmatpush1.msra.mxu0 0.0
    %656 = vmatprep.subr.mxu0 0.0
    %657 = vmatpush1.msra.mxu0 0.0
    %658 = vmatprep.subr.mxu0 0.0
    %659 = vmatpush1.msra.mxu0 0.0
    %660 = vmatprep.subr.mxu0 0.0
    %661 = vmatpush1.msra.mxu0 0.0
    %662 = vmatprep.subr.mxu0 0.0
    %663 = vmatpush1.msra.mxu0 0.0
    %664 = vmatprep.subr.mxu0 0.0
    %665 = vmatpush1.msra.mxu0 0.0
    %666 = vmatprep.subr.mxu0 0.0
    %667 = vmatpush1.msra.mxu0 0.0
    %668 = vmatprep.subr.mxu0 0.0
    %669 = vmatpush1.msra.mxu0 0.0
    %670 = vmatprep.subr.mxu0 0.0
    %671 = vmatpush1.msra.mxu0 0.0
    %672 = vmatprep.subr.mxu0 0.0
    %673 = vmatpush1.msra.mxu0 0.0
    %674 = vmatprep.subr.mxu0 0.0
    %675 = vmatpush1.msra.mxu0 0.0
    %676 = vmatprep.subr.mxu0 0.0
    %677 = vmatpush1.msra.mxu0 0.0
    %678 = vmatprep.subr.mxu0 0.0
    %679 = vmatpush1.msra.mxu0 0.0
    %680 = vmatprep.subr.mxu0 0.0
    %681 = vmatpush1.msra.mxu0 0.0
    %682 = vmatprep.subr.mxu0 0.0
    %683 = vmatpush1.msra.mxu0 0.0
    %684 = vmatprep.subr.mxu0 0.0
    %685 = vmatpush1.msra.mxu0 0.0
    %686 = vmatprep.subr.mxu0 0.0
    %687 = vmatpush1.msra.mxu0 0.0
    %688 = vmatprep.subr.mxu0 0.0
    %689 = vmatpush1.msra.mxu0 0.0
    %690 = vmatprep.mubr.f32.mxu0 0.0
    %691 = vmatmul.mubr.f32.gmra.mrb[0].mxu0 %v624
    %v692 = vpop.f32.mrb[0].mxu0
    %v693 = vadd.f32 %v236, %v692
    %v694 = vpop.f32.mrb[0].mxu0
    %v695 = vadd.f32 %v240, %v694
    %696 = vdwg.mxu0
    %v697 = vsel %vm258, %v523, 0
    %699 = vmatprep.subr.mxu0 %v216
    %700 = vmatpush1.msra.mxu0 %v215
    %701 = vmatprep.subr.mxu0 %v218
    %702 = vmatpush1.msra.mxu0 %v217
    %703 = vmatprep.subr.mxu0 %v220
    %704 = vmatpush1.msra.mxu0 %v219
    %705 = vmatprep.subr.mxu0 %v222
    %706 = vmatpush1.msra.mxu0 %v221
    %707 = vmatprep.subr.mxu0 %v224
    %708 = vmatpush1.msra.mxu0 %v223
    %709 = vmatprep.subr.mxu0 %v226
    %710 = vmatpush1.msra.mxu0 %v225
    %711 = vmatprep.subr.mxu0 %v228
    %712 = vmatpush1.msra.mxu0 %v227
    %713 = vmatprep.subr.mxu0 %v230
    %714 = vmatpush1.msra.mxu0 %v229
    %715 = vmatprep.subr.mxu0 0.0
    %716 = vmatpush1.msra.mxu0 0.0
    %717 = vmatprep.subr.mxu0 0.0
    %718 = vmatpush1.msra.mxu0 0.0
    %719 = vmatprep.subr.mxu0 0.0
    %720 = vmatpush1.msra.mxu0 0.0
    %721 = vmatprep.subr.mxu0 0.0
    %722 = vmatpush1.msra.mxu0 0.0
    %723 = vmatprep.subr.mxu0 0.0
    %724 = vmatpush1.msra.mxu0 0.0
    %725 = vmatprep.subr.mxu0 0.0
    %726 = vmatpush1.msra.mxu0 0.0
    %727 = vmatprep.subr.mxu0 0.0
    %728 = vmatpush1.msra.mxu0 0.0
    %729 = vmatprep.subr.mxu0 0.0
    %730 = vmatpush1.msra.mxu0 0.0
    %731 = vmatprep.subr.mxu0 0.0
    %732 = vmatpush1.msra.mxu0 0.0
    %733 = vmatprep.subr.mxu0 0.0
    %734 = vmatpush1.msra.mxu0 0.0
    %735 = vmatprep.subr.mxu0 0.0
    %736 = vmatpush1.msra.mxu0 0.0
    %737 = vmatprep.subr.mxu0 0.0
    %738 = vmatpush1.msra.mxu0 0.0
    %739 = vmatprep.subr.mxu0 0.0
    %740 = vmatpush1.msra.mxu0 0.0
    %741 = vmatprep.subr.mxu0 0.0
    %742 = vmatpush1.msra.mxu0 0.0
    %743 = vmatprep.subr.mxu0 0.0
    %744 = vmatpush1.msra.mxu0 0.0
    %745 = vmatprep.subr.mxu0 0.0
    %746 = vmatpush1.msra.mxu0 0.0
    %747 = vmatprep.subr.mxu0 0.0
    %748 = vmatpush1.msra.mxu0 0.0
    %749 = vmatprep.subr.mxu0 0.0
    %750 = vmatpush1.msra.mxu0 0.0
    %751 = vmatprep.subr.mxu0 0.0
    %752 = vmatpush1.msra.mxu0 0.0
    %753 = vmatprep.subr.mxu0 0.0
    %754 = vmatpush1.msra.mxu0 0.0
    %755 = vmatprep.subr.mxu0 0.0
    %756 = vmatpush1.msra.mxu0 0.0
    %757 = vmatprep.subr.mxu0 0.0
    %758 = vmatpush1.msra.mxu0 0.0
    %759 = vmatprep.subr.mxu0 0.0
    %760 = vmatpush1.msra.mxu0 0.0
    %761 = vmatprep.subr.mxu0 0.0
    %762 = vmatpush1.msra.mxu0 0.0
    %763 = vmatprep.mubr.f32.mxu0 0.0
    %764 = vmatmul.mubr.f32.gmra.mrb[0].mxu0 %v697
    %v765 = vpop.f32.mrb[0].mxu0
    %v766 = vadd.f32 0.0, %v765
    %v767 = vpop.f32.mrb[0].mxu0
    %v768 = vadd.f32 0.0, %v767
    %769 = vdwg.mxu0
    %v770 = vadd.f32 %v693, %v766
    %v771 = vxor.u32 %v770, 2147483648
    %v772 = vmul.f32 %v771, 1.442695
    %v773 = vpow.pop %v772
    %v774 = vadd.f32 %v773, 1.0
    %v775 = vrcp.pop %v774
    %v776 = vmul.f32 1.0, %v775
    %v777 = vadd.f32 %v768, %v255
    %v778 = vmul.f32 %v776, %v777
    %v779 = vadd.f32 %v695, %v778
    %v780 = vtanh.pop %v779
    %v781 = vsub.f32 1.0, %v776
    %783 = vrot.lane.b32.xlu0 %v780, 64
    %v784 = vpop.permute.xlu0 %783
    %v786 = vmul.f32 %v781, %v784
    %v787 = vmul.f32 %v776, %v520
    %v788 = vadd.f32 %v786, %v787
    %790 = vrot.lane.b32.xlu0 %v788, 64
    %v791 = vpop.permute.xlu0 %790
    %s793 = scalar_lea.vmem [#allocation3], 4
    %794 = vst.msk [vmem:[%s793] sm:$0xf] %vm525, %v791
    %v795 = vld [vmem:[#allocation3] sm:$0xf]
    %v796 = vld [vmem:[%s793] sm:$0xf]
    %v798 = vrot.slane %v796, 4
    %v800 = vsel %vm175, %v795, %v798
    %v801 = vld [vmem:[%s9] sm:$0xff]
    %v802 = vld [vmem:[%s9 + $0x8] sm:$0xff]
    %v803 = vld [vmem:[%s9 + $0x10] sm:$0xff]
    %v804 = vld [vmem:[%s9 + $0x18] sm:$0xff]
    %v805 = vld [vmem:[%s9 + $0x20] sm:$0xff]
    %v806 = vld [vmem:[%s9 + $0x28] sm:$0xff]
    %v807 = vld [vmem:[%s9 + $0x30] sm:$0xff]
    %v808 = vld [vmem:[%s9 + $0x38] sm:$0xff]
    %v809 = vld [vmem:[%s10] sm:$0x1]
    %v811 = vlaneseq
    %v812 = vshrl.u32 %v811, 7
    %v813 = vsub.s32 0, %v812
    %v814 = vrot.slane %v809, %v813
    %v817 = vsel %vm258, %v800, 0
    %819 = vmatprep.subr.mxu0 0.0
    %820 = vmatpush1.msra.mxu0 %v801
    %821 = vmatprep.subr.mxu0 0.0
    %822 = vmatpush1.msra.mxu0 %v802
    %823 = vmatprep.subr.mxu0 0.0
    %824 = vmatpush1.msra.mxu0 %v803
    %825 = vmatprep.subr.mxu0 0.0
    %826 = vmatpush1.msra.mxu0 %v804
    %827 = vmatprep.subr.mxu0 0.0
    %828 = vmatpush1.msra.mxu0 %v805
    %829 = vmatprep.subr.mxu0 0.0
    %830 = vmatpush1.msra.mxu0 %v806
    %831 = vmatprep.subr.mxu0 0.0
    %832 = vmatpush1.msra.mxu0 %v807
    %833 = vmatprep.subr.mxu0 0.0
    %834 = vmatpush1.msra.mxu0 %v808
    %835 = vmatprep.subr.mxu0 0.0
    %836 = vmatpush1.msra.mxu0 0.0
    %837 = vmatprep.subr.mxu0 0.0
    %838 = vmatpush1.msra.mxu0 0.0
    %839 = vmatprep.subr.mxu0 0.0
    %840 = vmatpush1.msra.mxu0 0.0
    %841 = vmatprep.subr.mxu0 0.0
    %842 = vmatpush1.msra.mxu0 0.0
    %843 = vmatprep.subr.mxu0 0.0
    %844 = vmatpush1.msra.mxu0 0.0
    %845 = vmatprep.subr.mxu0 0.0
    %846 = vmatpush1.msra.mxu0 0.0
    %847 = vmatprep.subr.mxu0 0.0
    %848 = vmatpush1.msra.mxu0 0.0
    %849 = vmatprep.subr.mxu0 0.0
    %850 = vmatpush1.msra.mxu0 0.0
    %851 = vmatprep.subr.mxu0 0.0
    %852 = vmatpush1.msra.mxu0 0.0
    %853 = vmatprep.subr.mxu0 0.0
    %854 = vmatpush1.msra.mxu0 0.0
    %855 = vmatprep.subr.mxu0 0.0
    %856 = vmatpush1.msra.mxu0 0.0
    %857 = vmatprep.subr.mxu0 0.0
    %858 = vmatpush1.msra.mxu0 0.0
    %859 = vmatprep.subr.mxu0 0.0
    %860 = vmatpush1.msra.mxu0 0.0
    %861 = vmatprep.subr.mxu0 0.0
    %862 = vmatpush1.msra.mxu0 0.0
    %863 = vmatprep.subr.mxu0 0.0
    %864 = vmatpush1.msra.mxu0 0.0
    %865 = vmatprep.subr.mxu0 0.0
    %866 = vmatpush1.msra.mxu0 0.0
    %867 = vmatprep.subr.mxu0 0.0
    %868 = vmatpush1.msra.mxu0 0.0
    %869 = vmatprep.subr.mxu0 0.0
    %870 = vmatpush1.msra.mxu0 0.0
    %871 = vmatprep.subr.mxu0 0.0
    %872 = vmatpush1.msra.mxu0 0.0
    %873 = vmatprep.subr.mxu0 0.0
    %874 = vmatpush1.msra.mxu0 0.0
    %875 = vmatprep.subr.mxu0 0.0
    %876 = vmatpush1.msra.mxu0 0.0
    %877 = vmatprep.subr.mxu0 0.0
    %878 = vmatpush1.msra.mxu0 0.0
    %879 = vmatprep.subr.mxu0 0.0
    %880 = vmatpush1.msra.mxu0 0.0
    %881 = vmatprep.subr.mxu0 0.0
    %882 = vmatpush1.msra.mxu0 0.0
    %883 = vmatprep.mubr.f32.mxu0 0.0
    %884 = vmatmul.mubr.f32.gmra.mrb[0].mxu0 %v817
    %v885 = vpop.f32.mrb[0].mxu0
    %v886 = vadd.f32 %v814, %v885
    %v887 = vpop.f32.mrb[0].mxu0
    %888 = vdwg.mxu0
    %vm889 = vcmask 31744
    %890 = vst.msk [vmem:[%s11] sm:$0xff] %vm889, %v886
    // Predicated region
    $region58: #{tpu_custom_call.1} parent=1 // pred_check
      _
    $region59: #{tpu_custom_call.1} parent=1 // pred_check_branch
      %892 = sbr.rel (0) target = $region61
    $region60: #{tpu_custom_call.1} parent=1 // pred_region
      _
    $region61: #{tpu_custom_call.1} parent=1 // pred_fallthru
      _
    // Predicated region
    $region62: #{tpu_custom_call.1} parent=1 // pred_check
      _
    $region63: #{tpu_custom_call.1} parent=1 // pred_check_branch
      %894 = sbr.rel (0) target = $region65
    $region64: #{tpu_custom_call.1} parent=1 // pred_region
      _
    $region65: #{tpu_custom_call.1} parent=1 // pred_fallthru
      _
    %895 = vsyncpa [#allocation5], 1
    %896 = vsyncpa [#allocation7], 1

</llo_original>
